<compile_context>
chip_gen: v6e
topology: v6e:2x2x1
jax: 0.10.0
libtpu: 0.0.40
codegen_flags: <defaults>
</compile_context>

<pallas_src>
import functools

import jax
import jax.numpy as jnp
from jax.experimental import pallas as pl
from jax.experimental.pallas import tpu as pltpu

OUT_LANES = 128  # lane-dense packed output width


def _pack_offsets(B, J, Cin, C, K):
    """Row offsets inside the single packed parameter array."""
    BJ = B * J
    o = {}
    r = 0
    o['w1'] = r; r += Cin          # [Cin, 2C]
    o['w2'] = r; r += C            # [C,   2C]
    o['wb'] = r; r += C            # [C,    K]
    o['b1'] = r; r += 1            # [1,   2C]
    o['b2'] = r; r += 1
    o['bb'] = r; r += 1            # [1,    K]
    o['gb1'] = r; r += 1           # [1, C|C] = gamma1 | beta1
    o['gb2'] = r; r += 1
    r = -(-r // 8) * 8             # 8-sublane align the graph block
    o['A'] = r; r += BJ            # [BJ, BJ] off-diag kron + diag col at lane BJ
    r = -(-r // 8) * 8
    o['pool'] = r; r += B          # [B, BJ] avg-pool matrix
    rows = -(-r // 8) * 8
    lanes = max(2 * C, K, BJ + 1)
    return o, rows, lanes


def depth_head_kernel(x_ref, p_ref, out_ref, *, B, J, Cin, C, K, offs):
    """x_ref: [B*J, Cin]; p_ref: packed params; out_ref: [B, OUT_LANES]."""
    BJ = B * J
    x = x_ref[...]
    P = p_ref[...]

    a_off = P[offs['A']:offs['A'] + BJ, 0:BJ]          # kron(I_B, att_offdiag)
    attd = P[offs['A']:offs['A'] + BJ, BJ:BJ + 1]      # tiled diag(att) [BJ, 1]
    pool = P[offs['pool']:offs['pool'] + B, 0:BJ]      # [B, BJ] avg-pool matrix

    def gcn(h, w_row, w_rows, b_row, gb_row):
        # h: [BJ, cin] -> [BJ, C]; one matmul for both 1x1 convs (lane-split),
        # one matmul for the graph contraction, folded-affine BN + ReLU.
        w = P[w_row:w_row + w_rows, 0:2 * C]           # [cin, 2C]
        b = P[b_row:b_row + 1, 0:2 * C]                # [1, 2C]
        g = P[gb_row:gb_row + 1, 0:C]                  # [1, C]
        be = P[gb_row:gb_row + 1, C:2 * C]             # [1, C]
        feat = jnp.dot(h, w, preferred_element_type=jnp.float32) + b
        fs = feat[:, 0:C]
        fo = feat[:, C:2 * C]
        out = jnp.dot(a_off, fo, preferred_element_type=jnp.float32) + attd * fs
        # BatchNorm1d training-mode stats over (B, J), single-pass biased var.
        mean = jnp.mean(out, axis=0, keepdims=True)
        var = jnp.mean(out * out, axis=0, keepdims=True) - mean * mean
        scale = g * jax.lax.rsqrt(var + 1e-5)
        shift = be - mean * scale
        return jnp.maximum(out * scale + shift, 0.0)   # ReLU

    h = gcn(x, offs['w1'], Cin, offs['b1'], offs['gb1'])
    h = gcn(h, offs['w2'], C, offs['b2'], offs['gb2'])

    # Avg-pool over joints as a non-batched matmul on the 2-D view.
    pooled = jnp.dot(pool, h, preferred_element_type=jnp.float32)   # [B, C]

    # out_bins Linear + softmax + soft-argmax bin index.
    wb = P[offs['wb']:offs['wb'] + C, 0:K]
    bb = P[offs['bb']:offs['bb'] + 1, 0:K]
    logits = jnp.dot(pooled, wb, preferred_element_type=jnp.float32) + bb
    m = jnp.max(logits, axis=-1, keepdims=True)
    e = jnp.exp(logits - m)
    p = e / jnp.sum(e, axis=-1, keepdims=True)                      # [B, K]
    bin_vals = jax.lax.broadcasted_iota(
        jnp.int32, (1, K), 1).astype(jnp.float32)
    idx = jnp.sum(p * bin_vals, axis=-1, keepdims=True)             # [B, 1]

    # Single lane-dense store: bins in lanes [0, K), idx replicated after.
    out_ref[...] = jnp.concatenate(
        [p, jnp.broadcast_to(idx, (B, OUT_LANES - K))], axis=1)


def rootnet_depth_head(x, adj, params):
    """x: [B, J, C_in] depth features; adj: [J, J]; returns (bins, bin_idx)."""
    B, J, Cin = x.shape
    C = params['l1']['gamma'].shape[1]
    K = params['w_bins'].shape[1]
    BJ = B * J
    offs, rows, lanes = _pack_offsets(B, J, Cin, C, K)

    # ---- host-side prep (tiny, hoistable/cacheable in practice) ----
    att = adj / jnp.sum(adj, axis=-1, keepdims=True)                 # [J, J]
    eye_j = jnp.eye(J, dtype=jnp.float32)
    a_off = jnp.kron(jnp.eye(B, dtype=jnp.float32), att * (1.0 - eye_j))  # [BJ,BJ]
    attd_col = jnp.tile(jnp.diagonal(att)[:, None], (B, 1))          # [BJ, 1]
    pool_mat = jnp.kron(jnp.eye(B, dtype=jnp.float32),
                        jnp.full((1, J), 1.0 / J, jnp.float32))      # [B, BJ]

    def cat(lp):
        w = jnp.concatenate([lp['w_self'], lp['w_oth']], axis=1)     # [cin, 2C]
        b = jnp.concatenate([lp['b_self'], lp['b_oth']], axis=1)     # [1, 2C]
        return w, b

    w1, b1 = cat(params['l1'])
    w2, b2 = cat(params['l2'])

    P = jnp.zeros((rows, lanes), jnp.float32)
    P = P.at[offs['w1']:offs['w1'] + Cin, 0:2 * C].set(w1)
    P = P.at[offs['w2']:offs['w2'] + C, 0:2 * C].set(w2)
    P = P.at[offs['wb']:offs['wb'] + C, 0:K].set(params['w_bins'])
    P = P.at[offs['b1'], 0:2 * C].set(b1[0])
    P = P.at[offs['b2'], 0:2 * C].set(b2[0])
    P = P.at[offs['bb'], 0:K].set(params['b_bins'][0])
    P = P.at[offs['gb1'], 0:C].set(params['l1']['gamma'][0])
    P = P.at[offs['gb1'], C:2 * C].set(params['l1']['beta'][0])
    P = P.at[offs['gb2'], 0:C].set(params['l2']['gamma'][0])
    P = P.at[offs['gb2'], C:2 * C].set(params['l2']['beta'][0])
    P = P.at[offs['A']:offs['A'] + BJ, 0:BJ].set(a_off)
    P = P.at[offs['A']:offs['A'] + BJ, BJ:BJ + 1].set(attd_col)
    P = P.at[offs['pool']:offs['pool'] + B, 0:BJ].set(pool_mat)

    x2 = x.reshape(BJ, Cin)                                          # flat rows

    vmem = pl.BlockSpec(memory_space=pltpu.MemorySpace.VMEM)
    out = pl.pallas_call(
        functools.partial(depth_head_kernel,
                          B=B, J=J, Cin=Cin, C=C, K=K, offs=offs),
        out_shape=jax.ShapeDtypeStruct((B, OUT_LANES), jnp.float32),
        in_specs=[vmem, vmem],
        out_specs=vmem,
    )(x2, P)

    bins = out[:, :K]
    bin_idx = out[:, K]
    return bins, bin_idx


def reference(x, adj, p):
    """Pure-JAX reference mirroring the PyTorch forward exactly."""
    B, J, _ = x.shape
    att = adj / jnp.sum(adj, axis=-1, keepdims=True)
    att_b = jnp.broadcast_to(att, (B, J, J))
    eye = jnp.eye(J, dtype=jnp.float32)

    def layer(h, lp):
        fs = h @ lp['w_self'] + lp['b_self']
        fo = h @ lp['w_oth'] + lp['b_oth']
        out = jnp.matmul(att_b * eye, fs) + jnp.matmul(att_b * (1.0 - eye), fo)
        mean = jnp.mean(out, axis=(0, 1), keepdims=True)
        var = jnp.mean((out - mean) ** 2, axis=(0, 1), keepdims=True)
        out = (out - mean) / jnp.sqrt(var + 1e-5) * lp['gamma'] + lp['beta']
        return jnp.maximum(out, 0.0)

    h = layer(x, p['l1'])
    h = layer(h, p['l2'])
    pooled = jnp.mean(h, axis=1)
    logits = pooled @ p['w_bins'] + p['b_bins']
    probs = jax.nn.softmax(logits, axis=-1)
    idx = jnp.sum(probs * jnp.arange(logits.shape[-1], dtype=jnp.float32), axis=-1)
    return probs, idx


def init_layer_params(key, c_in, c_out):
    k1, k2, k3, k4 = jax.random.split(key, 4)
    bound = 1.0 / jnp.sqrt(c_in)
    return {
        # Conv1d(k=1) weight [C_out, C_in, 1] stored transposed as [C_in, C_out]
        'w_self': jax.random.uniform(k1, (c_in, c_out), jnp.float32, -bound, bound),
        'b_self': jax.random.uniform(k2, (1, c_out), jnp.float32, -bound, bound),
        'w_oth': jax.random.uniform(k3, (c_in, c_out), jnp.float32, -bound, bound),
        'b_oth': jax.random.uniform(k4, (1, c_out), jnp.float32, -bound, bound),
        # BatchNorm1d affine (PyTorch init: gamma=1, beta=0)
        'gamma': jnp.ones((1, c_out), jnp.float32),
        'beta': jnp.zeros((1, c_out), jnp.float32),
    }


if __name__ == "__main__":
    B, J, C_IN, C, K = 2, 8, 16, 32, 64
    key = jax.random.PRNGKey(0)
    kx, kadj, k1, k2, kb1, kb2 = jax.random.split(key, 6)

    x = jax.random.normal(kx, (B, J, C_IN), jnp.float32)
    adj = (jax.random.uniform(kadj, (J, J)) > 0.5).astype(jnp.float32) \
        + jnp.eye(J, dtype=jnp.float32)

    lin_bound = 1.0 / jnp.sqrt(C)
    params = {
        'l1': init_layer_params(k1, C_IN, C),
        'l2': init_layer_params(k2, C, C),
        'w_bins': jax.random.uniform(kb1, (C, K), jnp.float32, -lin_bound, lin_bound),
        'b_bins': jax.random.uniform(kb2, (1, K), jnp.float32, -lin_bound, lin_bound),
    }

    bins, bin_idx = rootnet_depth_head(x, adj, params)
    bins, bin_idx = jax.block_until_ready((bins, bin_idx))

    ref_bins, ref_idx = reference(x, adj, params)
    assert bins.shape == (B, K) and bin_idx.shape == (B,)
    assert jnp.allclose(bins, ref_bins, atol=1e-4, rtol=1e-4)
    assert jnp.allclose(bin_idx, ref_idx, atol=1e-2, rtol=1e-4)
    print("KERNEL_OK")
</pallas_src>

<mosaic_0001>
module attributes {stable_mosaic.version = 11 : i64} {
  func.func @depth_head_kernel(%arg0: memref<16x16xf32, #tpu.memory_space<vmem>>, %arg1: memref<112x64xf32, #tpu.memory_space<vmem>>, %arg2: memref<2x128xf32, #tpu.memory_space<vmem>>) attributes {dimension_semantics = [], scalar_prefetch = 0 : i64, scratch_operands = 0 : i64, tpu.core_type = #tpu.core_type<tc>} {
    %c0 = arith.constant 0 : index
    %c0_0 = arith.constant 0 : index
    %0 = vector.load %arg0[%c0, %c0_0] : memref<16x16xf32, #tpu.memory_space<vmem>>, vector<16x16xf32>
    %c0_1 = arith.constant 0 : index
    %c0_2 = arith.constant 0 : index
    %1 = vector.load %arg1[%c0_1, %c0_2] : memref<112x64xf32, #tpu.memory_space<vmem>>, vector<112x64xf32>
    %2 = vector.extract_strided_slice %1 {offsets = [88, 0], sizes = [16, 16], strides = [1, 1]} : vector<112x64xf32> to vector<16x16xf32>
    %3 = vector.extract_strided_slice %1 {offsets = [88, 16], sizes = [16, 1], strides = [1, 1]} : vector<112x64xf32> to vector<16x1xf32>
    %4 = vector.extract_strided_slice %1 {offsets = [104, 0], sizes = [2, 16], strides = [1, 1]} : vector<112x64xf32> to vector<2x16xf32>
    %5 = vector.extract_strided_slice %1 {offsets = [0, 0], sizes = [16, 64], strides = [1, 1]} : vector<112x64xf32> to vector<16x64xf32>
    %6 = vector.extract_strided_slice %1 {offsets = [80, 0], sizes = [1, 64], strides = [1, 1]} : vector<112x64xf32> to vector<1x64xf32>
    %7 = vector.extract_strided_slice %1 {offsets = [83, 0], sizes = [1, 32], strides = [1, 1]} : vector<112x64xf32> to vector<1x32xf32>
    %8 = vector.extract_strided_slice %1 {offsets = [83, 32], sizes = [1, 32], strides = [1, 1]} : vector<112x64xf32> to vector<1x32xf32>
    %cst = arith.constant dense<0.000000e+00> : vector<16x64xf32>
    %9 = tpu.matmul %0, %5, %cst {dimension_numbers = #tpu.dot_dimension_numbers<[1], [0], [0], [1], [0, 0, 1, 1], [], []>} : vector<16x16xf32>, vector<16x64xf32>, vector<16x64xf32> -> vector<16x64xf32>
    %10 = vector.broadcast %6 : vector<1x64xf32> to vector<16x64xf32>
    %11 = arith.addf %9, %10 : vector<16x64xf32>
    %12 = vector.extract_strided_slice %11 {offsets = [0, 0], sizes = [16, 32], strides = [1, 1]} : vector<16x64xf32> to vector<16x32xf32>
    %13 = vector.extract_strided_slice %11 {offsets = [0, 32], sizes = [16, 32], strides = [1, 1]} : vector<16x64xf32> to vector<16x32xf32>
    %cst_3 = arith.constant dense<0.000000e+00> : vector<16x32xf32>
    %14 = tpu.matmul %2, %13, %cst_3 {dimension_numbers = #tpu.dot_dimension_numbers<[1], [0], [0], [1], [0, 0, 1, 1], [], []>} : vector<16x16xf32>, vector<16x32xf32>, vector<16x32xf32> -> vector<16x32xf32>
    %15 = vector.broadcast %3 : vector<16x1xf32> to vector<16x32xf32>
    %16 = arith.mulf %15, %12 : vector<16x32xf32>
    %17 = arith.addf %14, %16 : vector<16x32xf32>
    %cst_4 = arith.constant dense<0.000000e+00> : vector<32xf32>
    %18 = vector.multi_reduction <add>, %17, %cst_4 [0] : vector<16x32xf32> to vector<32xf32>
    %19 = vector.shape_cast %18 : vector<32xf32> to vector<1x32xf32>
    %cst_5 = arith.constant 1.600000e+01 : f32
    %20 = vector.broadcast %cst_5 : f32 to vector<1x32xf32>
    %21 = arith.divf %19, %20 : vector<1x32xf32>
    %22 = arith.mulf %17, %17 : vector<16x32xf32>
    %cst_6 = arith.constant dense<0.000000e+00> : vector<32xf32>
    %23 = vector.multi_reduction <add>, %22, %cst_6 [0] : vector<16x32xf32> to vector<32xf32>
    %24 = vector.shape_cast %23 : vector<32xf32> to vector<1x32xf32>
    %cst_7 = arith.constant 1.600000e+01 : f32
    %25 = vector.broadcast %cst_7 : f32 to vector<1x32xf32>
    %26 = arith.divf %24, %25 : vector<1x32xf32>
    %27 = arith.mulf %21, %21 : vector<1x32xf32>
    %28 = arith.subf %26, %27 : vector<1x32xf32>
    %cst_8 = arith.constant 9.99999974E-6 : f32
    %29 = vector.broadcast %cst_8 : f32 to vector<1x32xf32>
    %30 = arith.addf %28, %29 : vector<1x32xf32>
    %31 = math.rsqrt %30 : vector<1x32xf32>
    %32 = arith.mulf %7, %31 : vector<1x32xf32>
    %33 = arith.mulf %21, %32 : vector<1x32xf32>
    %34 = arith.subf %8, %33 : vector<1x32xf32>
    %35 = vector.broadcast %32 : vector<1x32xf32> to vector<16x32xf32>
    %36 = arith.mulf %17, %35 : vector<16x32xf32>
    %37 = vector.broadcast %34 : vector<1x32xf32> to vector<16x32xf32>
    %38 = arith.addf %36, %37 : vector<16x32xf32>
    %cst_9 = arith.constant 0.000000e+00 : f32
    %39 = vector.broadcast %cst_9 : f32 to vector<16x32xf32>
    %40 = arith.maximumf %38, %39 : vector<16x32xf32>
    %41 = vector.extract_strided_slice %1 {offsets = [16, 0], sizes = [32, 64], strides = [1, 1]} : vector<112x64xf32> to vector<32x64xf32>
    %42 = vector.extract_strided_slice %1 {offsets = [81, 0], sizes = [1, 64], strides = [1, 1]} : vector<112x64xf32> to vector<1x64xf32>
    %43 = vector.extract_strided_slice %1 {offsets = [84, 0], sizes = [1, 32], strides = [1, 1]} : vector<112x64xf32> to vector<1x32xf32>
    %44 = vector.extract_strided_slice %1 {offsets = [84, 32], sizes = [1, 32], strides = [1, 1]} : vector<112x64xf32> to vector<1x32xf32>
    %cst_10 = arith.constant dense<0.000000e+00> : vector<16x64xf32>
    %45 = tpu.matmul %40, %41, %cst_10 {dimension_numbers = #tpu.dot_dimension_numbers<[1], [0], [0], [1], [0, 0, 1, 1], [], []>} : vector<16x32xf32>, vector<32x64xf32>, vector<16x64xf32> -> vector<16x64xf32>
    %46 = vector.broadcast %42 : vector<1x64xf32> to vector<16x64xf32>
    %47 = arith.addf %45, %46 : vector<16x64xf32>
    %48 = vector.extract_strided_slice %47 {offsets = [0, 0], sizes = [16, 32], strides = [1, 1]} : vector<16x64xf32> to vector<16x32xf32>
    %49 = vector.extract_strided_slice %47 {offsets = [0, 32], sizes = [16, 32], strides = [1, 1]} : vector<16x64xf32> to vector<16x32xf32>
    %cst_11 = arith.constant dense<0.000000e+00> : vector<16x32xf32>
    %50 = tpu.matmul %2, %49, %cst_11 {dimension_numbers = #tpu.dot_dimension_numbers<[1], [0], [0], [1], [0, 0, 1, 1], [], []>} : vector<16x16xf32>, vector<16x32xf32>, vector<16x32xf32> -> vector<16x32xf32>
    %51 = vector.broadcast %3 : vector<16x1xf32> to vector<16x32xf32>
    %52 = arith.mulf %51, %48 : vector<16x32xf32>
    %53 = arith.addf %50, %52 : vector<16x32xf32>
    %cst_12 = arith.constant dense<0.000000e+00> : vector<32xf32>
    %54 = vector.multi_reduction <add>, %53, %cst_12 [0] : vector<16x32xf32> to vector<32xf32>
    %55 = vector.shape_cast %54 : vector<32xf32> to vector<1x32xf32>
    %cst_13 = arith.constant 1.600000e+01 : f32
    %56 = vector.broadcast %cst_13 : f32 to vector<1x32xf32>
    %57 = arith.divf %55, %56 : vector<1x32xf32>
    %58 = arith.mulf %53, %53 : vector<16x32xf32>
    %cst_14 = arith.constant dense<0.000000e+00> : vector<32xf32>
    %59 = vector.multi_reduction <add>, %58, %cst_14 [0] : vector<16x32xf32> to vector<32xf32>
    %60 = vector.shape_cast %59 : vector<32xf32> to vector<1x32xf32>
    %cst_15 = arith.constant 1.600000e+01 : f32
    %61 = vector.broadcast %cst_15 : f32 to vector<1x32xf32>
    %62 = arith.divf %60, %61 : vector<1x32xf32>
    %63 = arith.mulf %57, %57 : vector<1x32xf32>
    %64 = arith.subf %62, %63 : vector<1x32xf32>
    %cst_16 = arith.constant 9.99999974E-6 : f32
    %65 = vector.broadcast %cst_16 : f32 to vector<1x32xf32>
    %66 = arith.addf %64, %65 : vector<1x32xf32>
    %67 = math.rsqrt %66 : vector<1x32xf32>
    %68 = arith.mulf %43, %67 : vector<1x32xf32>
    %69 = arith.mulf %57, %68 : vector<1x32xf32>
    %70 = arith.subf %44, %69 : vector<1x32xf32>
    %71 = vector.broadcast %68 : vector<1x32xf32> to vector<16x32xf32>
    %72 = arith.mulf %53, %71 : vector<16x32xf32>
    %73 = vector.broadcast %70 : vector<1x32xf32> to vector<16x32xf32>
    %74 = arith.addf %72, %73 : vector<16x32xf32>
    %cst_17 = arith.constant 0.000000e+00 : f32
    %75 = vector.broadcast %cst_17 : f32 to vector<16x32xf32>
    %76 = arith.maximumf %74, %75 : vector<16x32xf32>
    %cst_18 = arith.constant dense<0.000000e+00> : vector<2x32xf32>
    %77 = tpu.matmul %4, %76, %cst_18 {dimension_numbers = #tpu.dot_dimension_numbers<[1], [0], [0], [1], [0, 0, 1, 1], [], []>} : vector<2x16xf32>, vector<16x32xf32>, vector<2x32xf32> -> vector<2x32xf32>
    %78 = vector.extract_strided_slice %1 {offsets = [48, 0], sizes = [32, 64], strides = [1, 1]} : vector<112x64xf32> to vector<32x64xf32>
    %79 = vector.extract_strided_slice %1 {offsets = [82, 0], sizes = [1, 64], strides = [1, 1]} : vector<112x64xf32> to vector<1x64xf32>
    %cst_19 = arith.constant dense<0.000000e+00> : vector<2x64xf32>
    %80 = tpu.matmul %77, %78, %cst_19 {dimension_numbers = #tpu.dot_dimension_numbers<[1], [0], [0], [1], [0, 0, 1, 1], [], []>} : vector<2x32xf32>, vector<32x64xf32>, vector<2x64xf32> -> vector<2x64xf32>
    %81 = vector.broadcast %79 : vector<1x64xf32> to vector<2x64xf32>
    %82 = arith.addf %80, %81 : vector<2x64xf32>
    %cst_20 = arith.constant dense<0xFF800000> : vector<2xf32>
    %83 = vector.multi_reduction <maximumf>, %82, %cst_20 [1] : vector<2x64xf32> to vector<2xf32>
    %84 = vector.shape_cast %83 : vector<2xf32> to vector<2x1xf32>
    %85 = vector.broadcast %84 : vector<2x1xf32> to vector<2x64xf32>
    %86 = arith.subf %82, %85 : vector<2x64xf32>
    %87 = math.exp %86 : vector<2x64xf32>
    %cst_21 = arith.constant dense<0.000000e+00> : vector<2xf32>
    %88 = vector.multi_reduction <add>, %87, %cst_21 [1] : vector<2x64xf32> to vector<2xf32>
    %89 = vector.shape_cast %88 : vector<2xf32> to vector<2x1xf32>
    %90 = vector.broadcast %89 : vector<2x1xf32> to vector<2x64xf32>
    %91 = arith.divf %87, %90 : vector<2x64xf32>
    %92 = tpu.iota {dimensions = array<i32: 1>} : vector<1x64xi32>
    %93 = arith.sitofp %92 : vector<1x64xi32> to vector<1x64xf32>
    %94 = vector.broadcast %93 : vector<1x64xf32> to vector<2x64xf32>
    %95 = arith.mulf %91, %94 : vector<2x64xf32>
    %cst_22 = arith.constant dense<0.000000e+00> : vector<2xf32>
    %96 = vector.multi_reduction <add>, %95, %cst_22 [1] : vector<2x64xf32> to vector<2xf32>
    %97 = vector.shape_cast %96 : vector<2xf32> to vector<2x1xf32>
    %98 = vector.shape_cast %97 : vector<2x1xf32> to vector<2x1xf32>
    %99 = vector.broadcast %98 : vector<2x1xf32> to vector<2x64xf32>
    %100 = tpu.concatenate %91, %99 in 1 : vector<2x64xf32>, vector<2x64xf32> -> vector<2x128xf32>
    %c0_23 = arith.constant 0 : index
    %c0_24 = arith.constant 0 : index
    %101 = vector.load %arg2[%c0_23, %c0_24] : memref<2x128xf32, #tpu.memory_space<vmem>>, vector<2x128xf32>
    tpu.vector_store %arg2[%c0_23, %c0_24], %100 {strides = array<i32>} : memref<2x128xf32, #tpu.memory_space<vmem>>, vector<2x128xf32>,
    return
  }
}

</mosaic_0001>

<llo_original>
// kernel: tpu_custom_call.1
$region0: #{tpu_custom_call.1}
  #allocation0 [shape = 'u32[]', space=smem, size = 0x4, offset = 0x4, fixed_abs, tag = 'smem constant byte address 0x4 - core index']
  #allocation1 [shape = 'u32[144,128]{1,0:T(1,128)}', space=vmem, size = 0x12000, scoped, tag = 'internal scratch']
  %s0 = inlined_call_operand.vmem [shape: f32[16,16], index: 0, kind: input, shape index: {}]
  %s1 = inlined_call_operand.vmem [shape: f32[112,64], index: 1, kind: input, shape index: {}]
  %s2 = inlined_call_operand.hbm [shape: f32[2,128], index: 2, kind: output, shape index: {}]
  %s3 = sld [smem:[#allocation0]]
  $region18: #{tpu_custom_call.1} parent=0
    _
  %s5 = ssub.s32 1, %s3
  %s6 = scalar_select 0, %s5, %s3
  $region1: #{tpu_custom_call.1} parent=0
    #allocation2 [shape = 'u8[1024]{0}', space=vmem, size = 0x400, scoped, tag = 'output window, operand 0, single buffered']
    #allocation3 [shape = 's32[1]{0}', space=sflag, size = 0x4, scoped, tag = 'scoped memory for tpu_custom_call.1']
    %7 = vsyncpa [#allocation3], 0
    // Predicated region
    $region2: #{tpu_custom_call.1} parent=1 // pred_check
      _
    $region3: #{tpu_custom_call.1} parent=1 // pred_check_branch
      %9 = sbr.rel (0) target = $region5
    $region4: #{tpu_custom_call.1} parent=1 // pred_region
      _
    $region5: #{tpu_custom_call.1} parent=1 // pred_fallthru
      _
    // Predicated region
    $region6: #{tpu_custom_call.1} parent=1 // pred_check
      _
    $region7: #{tpu_custom_call.1} parent=1 // pred_check_branch
      %11 = sbr.rel (0) target = $region9
    $region8: #{tpu_custom_call.1} parent=1 // pred_region
      _
    $region9: #{tpu_custom_call.1} parent=1 // pred_fallthru
      _
    %v12 = vld [vmem:[%s0] sm:$0xff]
    %v13 = vld [vmem:[%s0 + $0x8] sm:$0xff]
    %v14 = vld [vmem:[%s1] sm:$0xff]
    %v15 = vld [vmem:[%s1 + $0x8] sm:$0xff]
    %v16 = vld [vmem:[%s1 + $0x10] sm:$0xff]
    %v17 = vld [vmem:[%s1 + $0x18] sm:$0xff]
    %v18 = vld [vmem:[%s1 + $0x20] sm:$0xff]
    %v19 = vld [vmem:[%s1 + $0x28] sm:$0xff]
    %v20 = vld [vmem:[%s1 + $0x30] sm:$0xff]
    %v21 = vld [vmem:[%s1 + $0x38] sm:$0xff]
    %v22 = vld [vmem:[%s1 + $0x40] sm:$0xff]
    %v23 = vld [vmem:[%s1 + $0x48] sm:$0xff]
    %v24 = vld [vmem:[%s1 + $0x50] sm:$0xff]
    %v25 = vld [vmem:[%s1 + $0x58] sm:$0xff]
    %v26 = vld [vmem:[%s1 + $0x60] sm:$0xff]
    %v27 = vld [vmem:[%s1 + $0x68] sm:$0xff]
    %v28 = vlaneseq
    %v29 = vshrl.u32 %v28, 7
    %v30 = vsub.s32 0, %v29
    %v31 = vrot.slane %v24, %v30
    %vm32 = vcmask 130048
    %v34 = vsel %vm32, %v12, 0
    %v37 = vsel %vm32, %v13, 0
    %39 = vmatprep.subr.mxu0 0.0
    %40 = vmatpush1.msra.mxu0 0.0
    %41 = vmatprep.subr.mxu0 0.0
    %42 = vmatpush1.msra.mxu0 0.0
    %43 = vmatprep.subr.mxu0 0.0
    %44 = vmatpush1.msra.mxu0 0.0
    %45 = vmatprep.subr.mxu0 0.0
    %46 = vmatpush1.msra.mxu0 0.0
    %47 = vmatprep.subr.mxu0 0.0
    %48 = vmatpush1.msra.mxu0 0.0
    %49 = vmatprep.subr.mxu0 0.0
    %50 = vmatpush1.msra.mxu0 0.0
    %51 = vmatprep.subr.mxu0 0.0
    %52 = vmatpush1.msra.mxu0 0.0
    %53 = vmatprep.subr.mxu0 0.0
    %54 = vmatpush1.msra.mxu0 0.0
    %55 = vmatprep.subr.mxu0 0.0
    %56 = vmatpush1.msra.mxu0 0.0
    %57 = vmatprep.subr.mxu0 0.0
    %58 = vmatpush1.msra.mxu0 0.0
    %59 = vmatprep.subr.mxu0 0.0
    %60 = vmatpush1.msra.mxu0 0.0
    %61 = vmatprep.subr.mxu0 0.0
    %62 = vmatpush1.msra.mxu0 0.0
    %63 = vmatprep.subr.mxu0 0.0
    %64 = vmatpush1.msra.mxu0 0.0
    %65 = vmatprep.subr.mxu0 0.0
    %66 = vmatpush1.msra.mxu0 0.0
    %67 = vmatprep.subr.mxu0 0.0
    %68 = vmatpush1.msra.mxu0 %v15
    %69 = vmatprep.subr.mxu0 0.0
    %70 = vmatpush1.msra.mxu0 %v14
    %71 = vmatprep.subr.mxu0 0.0
    %72 = vmatpush2.msra.mxu0 0.0
    %73 = vmatprep.subr.mxu0 0.0
    %74 = vmatpush2.msra.mxu0 0.0
    %75 = vmatprep.subr.mxu0 0.0
    %76 = vmatpush2.msra.mxu0 0.0
    %77 = vmatprep.subr.mxu0 0.0
    %78 = vmatpush2.msra.mxu0 0.0
    %79 = vmatprep.subr.mxu0 0.0
    %80 = vmatpush2.msra.mxu0 0.0
    %81 = vmatprep.subr.mxu0 0.0
    %82 = vmatpush2.msra.mxu0 0.0
    %83 = vmatprep.subr.mxu0 0.0
    %84 = vmatpush2.msra.mxu0 0.0
    %85 = vmatprep.subr.mxu0 0.0
    %86 = vmatpush2.msra.mxu0 0.0
    %87 = vmatprep.subr.mxu0 0.0
    %88 = vmatpush2.msra.mxu0 0.0
    %89 = vmatprep.subr.mxu0 0.0
    %90 = vmatpush2.msra.mxu0 0.0
    %91 = vmatprep.subr.mxu0 0.0
    %92 = vmatpush2.msra.mxu0 0.0
    %93 = vmatprep.subr.mxu0 0.0
    %94 = vmatpush2.msra.mxu0 0.0
    %95 = vmatprep.subr.mxu0 0.0
    %96 = vmatpush2.msra.mxu0 0.0
    %97 = vmatprep.subr.mxu0 0.0
    %98 = vmatpush2.msra.mxu0 0.0
    %99 = vmatprep.subr.mxu0 0.0
    %100 = vmatpush2.msra.mxu0 0.0
    %101 = vmatprep.subr.mxu0 0.0
    %102 = vmatpush2.msra.mxu0 0.0
    %103 = vmatprep.mubr.f32.mxu0 0.0
    %104 = vmatmul.mubr.f32.gmra.mxu0 %v34
    %v105 = vpop.f32.mrf.mxu0
    %v106 = vadd.f32 %v31, %v105
    %v107 = vpop.f32.mrf.mxu0
    %108 = vmatprep.mubr.f32.mxu0 0.0
    %109 = vmatmul.mubr.f32.gmra.mxu0 %v37
    %v110 = vpop.f32.mrf.mxu0
    %v111 = vadd.f32 %v31, %v110
    %v112 = vpop.f32.mrf.mxu0
    %113 = vdwg.mxu0
    %115 = vset.pattern.permute.xlu0 16
    %116 = vperm.xlu0 %115, %v25
    %v117 = vpop.permute.xlu0 %116
    %120 = vset.pattern.permute.xlu0 16
    %121 = vperm.xlu0 %120, %v26
    %v122 = vpop.permute.xlu0 %121
    %v124 = vmul.f32 %v117, %v106
    %v125 = vmul.f32 %v122, %v111
    %128 = vrot.lane.b32.xlu0 %v106, 96
    %v129 = vpop.permute.xlu0 %128
    %130 = vrot.lane.b32.xlu0 %v111, 96
    %v131 = vpop.permute.xlu0 %130
    %v134 = vsel %vm32, %v25, 0
    %v136 = vsel %vm32, %v26, 0
    %138 = vmatprep.subr.mxu0 0.0
    %139 = vmatpush1.msra.mxu0 0.0
    %140 = vmatprep.subr.mxu0 0.0
    %141 = vmatpush1.msra.mxu0 0.0
    %142 = vmatprep.subr.mxu0 0.0
    %143 = vmatpush1.msra.mxu0 0.0
    %144 = vmatprep.subr.mxu0 0.0
    %145 = vmatpush1.msra.mxu0 0.0
    %146 = vmatprep.subr.mxu0 0.0
    %147 = vmatpush1.msra.mxu0 0.0
    %148 = vmatprep.subr.mxu0 0.0
    %149 = vmatpush1.msra.mxu0 0.0
    %150 = vmatprep.subr.mxu0 0.0
    %151 = vmatpush1.msra.mxu0 0.0
    %152 = vmatprep.subr.mxu0 0.0
    %153 = vmatpush1.msra.mxu0 0.0
    %154 = vmatprep.subr.mxu0 0.0
    %155 = vmatpush1.msra.mxu0 0.0
    %156 = vmatprep.subr.mxu0 0.0
    %157 = vmatpush1.msra.mxu0 0.0
    %158 = vmatprep.subr.mxu0 0.0
    %159 = vmatpush1.msra.mxu0 0.0
    %160 = vmatprep.subr.mxu0 0.0
    %161 = vmatpush1.msra.mxu0 0.0
    %162 = vmatprep.subr.mxu0 0.0
    %163 = vmatpush1.msra.mxu0 0.0
    %164 = vmatprep.subr.mxu0 0.0
    %165 = vmatpush1.msra.mxu0 0.0
    %166 = vmatprep.subr.mxu0 0.0
    %167 = vmatpush1.msra.mxu0 %v131
    %168 = vmatprep.subr.mxu0 0.0
    %169 = vmatpush1.msra.mxu0 %v129
    %170 = vmatprep.subr.mxu0 0.0
    %171 = vmatpush2.msra.mxu0 0.0
    %172 = vmatprep.subr.mxu0 0.0
    %173 = vmatpush2.msra.mxu0 0.0
    %174 = vmatprep.subr.mxu0 0.0
    %175 = vmatpush2.msra.mxu0 0.0
    %176 = vmatprep.subr.mxu0 0.0
    %177 = vmatpush2.msra.mxu0 0.0
    %178 = vmatprep.subr.mxu0 0.0
    %179 = vmatpush2.msra.mxu0 0.0
    %180 = vmatprep.subr.mxu0 0.0
    %181 = vmatpush2.msra.mxu0 0.0
    %182 = vmatprep.subr.mxu0 0.0
    %183 = vmatpush2.msra.mxu0 0.0
    %184 = vmatprep.subr.mxu0 0.0
    %185 = vmatpush2.msra.mxu0 0.0
    %186 = vmatprep.subr.mxu0 0.0
    %187 = vmatpush2.msra.mxu0 0.0
    %188 = vmatprep.subr.mxu0 0.0
    %189 = vmatpush2.msra.mxu0 0.0
    %190 = vmatprep.subr.mxu0 0.0
    %191 = vmatpush2.msra.mxu0 0.0
    %192 = vmatprep.subr.mxu0 0.0
    %193 = vmatpush2.msra.mxu0 0.0
    %194 = vmatprep.subr.mxu0 0.0
    %195 = vmatpush2.msra.mxu0 0.0
    %196 = vmatprep.subr.mxu0 0.0
    %197 = vmatpush2.msra.mxu0 0.0
    %198 = vmatprep.subr.mxu0 0.0
    %199 = vmatpush2.msra.mxu0 0.0
    %200 = vmatprep.subr.mxu0 0.0
    %201 = vmatpush2.msra.mxu0 0.0
    %202 = vmatprep.mubr.f32.mxu0 0.0
    %203 = vmatmul.mubr.f32.gmra.mxu0 %v134
    %v204 = vpop.f32.mrf.mxu0
    %v205 = vadd.f32 %v124, %v204
    %v206 = vpop.f32.mrf.mxu0
    %207 = vmatprep.mubr.f32.mxu0 0.0
    %208 = vmatmul.mubr.f32.gmra.mxu0 %v136
    %v209 = vpop.f32.mrf.mxu0
    %v210 = vadd.f32 %v125, %v209
    %v211 = vpop.f32.mrf.mxu0
    %212 = vdwg.mxu0
    %vm213 = vcmask 261120
    %v214 = vsel %vm213, %v205, 0.0
    %v215 = vsel %vm213, %v210, 0.0
    %v216 = vadd.f32 %v214, %v215
    %v217 = vrot.slane %v216, 4
    %v218 = vadd.f32 %v216, %v217
    %v219 = vrot.slane %v218, 2
    %v220 = vadd.f32 %v218, %v219
    %v221 = vrot.slane %v220, 1
    %v222 = vadd.f32 %v220, %v221
    %v223 = vrcp.pop 16.0
    %v224 = vmul.f32 %v222, %v223
    %v225 = vmul.f32 %v205, %v205
    %v226 = vmul.f32 %v210, %v210
    %v227 = vsel %vm213, %v225, 0.0
    %v228 = vsel %vm213, %v226, 0.0
    %v229 = vadd.f32 %v227, %v228
    %v230 = vrot.slane %v229, 4
    %v231 = vadd.f32 %v229, %v230
    %v232 = vrot.slane %v231, 2
    %v233 = vadd.f32 %v231, %v232
    %v234 = vrot.slane %v233, 1
    %v235 = vadd.f32 %v233, %v234
    %v236 = vmul.f32 %v235, %v223
    %v237 = vmul.f32 %v224, %v224
    %v238 = vsub.f32 %v236, %v237
    %v239 = vadd.f32 %v238, 1e-05
    %v240 = vrsqrt.pop %v239
    %v241 = vmul.f32 %v24, %v240
    %v242 = vmul.f32 %v224, %v241
    %244 = vrot.lane.b32.xlu0 %v242, 32
    %v245 = vpop.permute.xlu0 %244
    %v247 = vsub.f32 %v24, %v245
    %v248 = vlaneseq
    %v249 = vshrl.u32 %v248, 7
    %v250 = vsub.s32 3, %v249
    %v251 = vrot.slane %v241, %v250
    %v252 = vmul.f32 %v205, %v251
    %v253 = vmul.f32 %v210, %v251
    %v254 = vlaneseq
    %v255 = vshrl.u32 %v254, 7
    %v256 = vsub.s32 3, %v255
    %v257 = vrot.slane %v247, %v256
    %259 = vrot.lane.b32.xlu0 %v257, 96
    %v260 = vpop.permute.xlu0 %259
    %v262 = vadd.f32 %v252, %v260
    %v263 = vadd.f32 %v253, %v260
    %v264 = vmax.f32 %v262, 0.0
    %v265 = vmax.f32 %v263, 0.0
    %v266 = vlaneseq
    %v267 = vshrl.u32 %v266, 7
    %v268 = vsub.s32 1, %v267
    %v269 = vrot.slane %v24, %v268
    %v271 = vsel %vm213, %v264, 0
    %v274 = vsel %vm213, %v265, 0
    %276 = vmatprep.subr.mxu0 0.0
    %277 = vmatpush1.msra.mxu0 0.0
    %278 = vmatprep.subr.mxu0 0.0
    %279 = vmatpush1.msra.mxu0 0.0
    %280 = vmatprep.subr.mxu0 0.0
    %281 = vmatpush1.msra.mxu0 0.0
    %282 = vmatprep.subr.mxu0 0.0
    %283 = vmatpush1.msra.mxu0 0.0
    %284 = vmatprep.subr.mxu0 0.0
    %285 = vmatpush1.msra.mxu0 0.0
    %286 = vmatprep.subr.mxu0 0.0
    %287 = vmatpush1.msra.mxu0 0.0
    %288 = vmatprep.subr.mxu0 0.0
    %289 = vmatpush1.msra.mxu0 0.0
    %290 = vmatprep.subr.mxu0 0.0
    %291 = vmatpush1.msra.mxu0 0.0
    %292 = vmatprep.subr.mxu0 0.0
    %293 = vmatpush1.msra.mxu0 0.0
    %294 = vmatprep.subr.mxu0 0.0
    %295 = vmatpush1.msra.mxu0 0.0
    %296 = vmatprep.subr.mxu0 0.0
    %297 = vmatpush1.msra.mxu0 0.0
    %298 = vmatprep.subr.mxu0 0.0
    %299 = vmatpush1.msra.mxu0 0.0
    %300 = vmatprep.subr.mxu0 0.0
    %301 = vmatpush1.msra.mxu0 %v19
    %302 = vmatprep.subr.mxu0 0.0
    %303 = vmatpush1.msra.mxu0 %v18
    %304 = vmatprep.subr.mxu0 0.0
    %305 = vmatpush1.msra.mxu0 %v17
    %306 = vmatprep.subr.mxu0 0.0
    %307 = vmatpush1.msra.mxu0 %v16
    %308 = vmatprep.subr.mxu0 0.0
    %309 = vmatpush2.msra.mxu0 0.0
    %310 = vmatprep.subr.mxu0 0.0
    %311 = vmatpush2.msra.mxu0 0.0
    %312 = vmatprep.subr.mxu0 0.0
    %313 = vmatpush2.msra.mxu0 0.0
    %314 = vmatprep.subr.mxu0 0.0
    %315 = vmatpush2.msra.mxu0 0.0
    %316 = vmatprep.subr.mxu0 0.0
    %317 = vmatpush2.msra.mxu0 0.0
    %318 = vmatprep.subr.mxu0 0.0
    %319 = vmatpush2.msra.mxu0 0.0
    %320 = vmatprep.subr.mxu0 0.0
    %321 = vmatpush2.msra.mxu0 0.0
    %322 = vmatprep.subr.mxu0 0.0
    %323 = vmatpush2.msra.mxu0 0.0
    %324 = vmatprep.subr.mxu0 0.0
    %325 = vmatpush2.msra.mxu0 0.0
    %326 = vmatprep.subr.mxu0 0.0
    %327 = vmatpush2.msra.mxu0 0.0
    %328 = vmatprep.subr.mxu0 0.0
    %329 = vmatpush2.msra.mxu0 0.0
    %330 = vmatprep.subr.mxu0 0.0
    %331 = vmatpush2.msra.mxu0 0.0
    %332 = vmatprep.subr.mxu0 0.0
    %333 = vmatpush2.msra.mxu0 0.0
    %334 = vmatprep.subr.mxu0 0.0
    %335 = vmatpush2.msra.mxu0 0.0
    %336 = vmatprep.subr.mxu0 0.0
    %337 = vmatpush2.msra.mxu0 0.0
    %338 = vmatprep.subr.mxu0 0.0
    %339 = vmatpush2.msra.mxu0 0.0
    %340 = vmatprep.mubr.f32.mxu0 0.0
    %341 = vmatmul.mubr.f32.gmra.mxu0 %v271
    %v342 = vpop.f32.mrf.mxu0
    %v343 = vadd.f32 %v269, %v342
    %v344 = vpop.f32.mrf.mxu0
    %345 = vmatprep.mubr.f32.mxu0 0.0
    %346 = vmatmul.mubr.f32.gmra.mxu0 %v274
    %v347 = vpop.f32.mrf.mxu0
    %v348 = vadd.f32 %v269, %v347
    %v349 = vpop.f32.mrf.mxu0
    %350 = vdwg.mxu0
    %v351 = vmul.f32 %v117, %v343
    %v352 = vmul.f32 %v122, %v348
    %355 = vrot.lane.b32.xlu0 %v343, 96
    %v356 = vpop.permute.xlu0 %355
    %357 = vrot.lane.b32.xlu0 %v348, 96
    %v358 = vpop.permute.xlu0 %357
    %361 = vmatprep.subr.mxu0 0.0
    %362 = vmatpush1.msra.mxu0 0.0
    %363 = vmatprep.subr.mxu0 0.0
    %364 = vmatpush1.msra.mxu0 0.0
    %365 = vmatprep.subr.mxu0 0.0
    %366 = vmatpush1.msra.mxu0 0.0
    %367 = vmatprep.subr.mxu0 0.0
    %368 = vmatpush1.msra.mxu0 0.0
    %369 = vmatprep.subr.mxu0 0.0
    %370 = vmatpush1.msra.mxu0 0.0
    %371 = vmatprep.subr.mxu0 0.0
    %372 = vmatpush1.msra.mxu0 0.0
    %373 = vmatprep.subr.mxu0 0.0
    %374 = vmatpush1.msra.mxu0 0.0
    %375 = vmatprep.subr.mxu0 0.0
    %376 = vmatpush1.msra.mxu0 0.0
    %377 = vmatprep.subr.mxu0 0.0
    %378 = vmatpush1.msra.mxu0 0.0
    %379 = vmatprep.subr.mxu0 0.0
    %380 = vmatpush1.msra.mxu0 0.0
    %381 = vmatprep.subr.mxu0 0.0
    %382 = vmatpush1.msra.mxu0 0.0
    %383 = vmatprep.subr.mxu0 0.0
    %384 = vmatpush1.msra.mxu0 0.0
    %385 = vmatprep.subr.mxu0 0.0
    %386 = vmatpush1.msra.mxu0 0.0
    %387 = vmatprep.subr.mxu0 0.0
    %388 = vmatpush1.msra.mxu0 0.0
    %389 = vmatprep.subr.mxu0 0.0
    %390 = vmatpush1.msra.mxu0 %v358
    %391 = vmatprep.subr.mxu0 0.0
    %392 = vmatpush1.msra.mxu0 %v356
    %393 = vmatprep.subr.mxu0 0.0
    %394 = vmatpush2.msra.mxu0 0.0
    %395 = vmatprep.subr.mxu0 0.0
    %396 = vmatpush2.msra.mxu0 0.0
    %397 = vmatprep.subr.mxu0 0.0
    %398 = vmatpush2.msra.mxu0 0.0
    %399 = vmatprep.subr.mxu0 0.0
    %400 = vmatpush2.msra.mxu0 0.0
    %401 = vmatprep.subr.mxu0 0.0
    %402 = vmatpush2.msra.mxu0 0.0
    %403 = vmatprep.subr.mxu0 0.0
    %404 = vmatpush2.msra.mxu0 0.0
    %405 = vmatprep.subr.mxu0 0.0
    %406 = vmatpush2.msra.mxu0 0.0
    %407 = vmatprep.subr.mxu0 0.0
    %408 = vmatpush2.msra.mxu0 0.0
    %409 = vmatprep.subr.mxu0 0.0
    %410 = vmatpush2.msra.mxu0 0.0
    %411 = vmatprep.subr.mxu0 0.0
    %412 = vmatpush2.msra.mxu0 0.0
    %413 = vmatprep.subr.mxu0 0.0
    %414 = vmatpush2.msra.mxu0 0.0
    %415 = vmatprep.subr.mxu0 0.0
    %416 = vmatpush2.msra.mxu0 0.0
    %417 = vmatprep.subr.mxu0 0.0
    %418 = vmatpush2.msra.mxu0 0.0
    %419 = vmatprep.subr.mxu0 0.0
    %420 = vmatpush2.msra.mxu0 0.0
    %421 = vmatprep.subr.mxu0 0.0
    %422 = vmatpush2.msra.mxu0 0.0
    %423 = vmatprep.subr.mxu0 0.0
    %424 = vmatpush2.msra.mxu0 0.0
    %425 = vmatprep.mubr.f32.mxu0 0.0
    %426 = vmatmul.mubr.f32.gmra.mxu0 %v134
    %v427 = vpop.f32.mrf.mxu0
    %v428 = vadd.f32 %v351, %v427
    %v429 = vpop.f32.mrf.mxu0
    %430 = vmatprep.mubr.f32.mxu0 0.0
    %431 = vmatmul.mubr.f32.gmra.mxu0 %v136
    %v432 = vpop.f32.mrf.mxu0
    %v433 = vadd.f32 %v352, %v432
    %v434 = vpop.f32.mrf.mxu0
    %435 = vdwg.mxu0
    %v436 = vsel %vm213, %v428, 0.0
    %v437 = vsel %vm213, %v433, 0.0
    %v438 = vadd.f32 %v436, %v437
    %v439 = vrot.slane %v438, 4
    %v440 = vadd.f32 %v438, %v439
    %v441 = vrot.slane %v440, 2
    %v442 = vadd.f32 %v440, %v441
    %v443 = vrot.slane %v442, 1
    %v444 = vadd.f32 %v442, %v443
    %v445 = vmul.f32 %v444, %v223
    %v446 = vmul.f32 %v428, %v428
    %v447 = vmul.f32 %v433, %v433
    %v448 = vsel %vm213, %v446, 0.0
    %v449 = vsel %vm213, %v447, 0.0
    %v450 = vadd.f32 %v448, %v449
    %v451 = vrot.slane %v450, 4
    %v452 = vadd.f32 %v450, %v451
    %v453 = vrot.slane %v452, 2
    %v454 = vadd.f32 %v452, %v453
    %v455 = vrot.slane %v454, 1
    %v456 = vadd.f32 %v454, %v455
    %v457 = vmul.f32 %v456, %v223
    %v458 = vmul.f32 %v445, %v445
    %v459 = vsub.f32 %v457, %v458
    %v460 = vadd.f32 %v459, 1e-05
    %v461 = vrsqrt.pop %v460
    %v462 = vmul.f32 %v24, %v461
    %v463 = vmul.f32 %v445, %v462
    %465 = vrot.lane.b32.xlu0 %v463, 32
    %v466 = vpop.permute.xlu0 %465
    %v468 = vsub.f32 %v24, %v466
    %v469 = vlaneseq
    %v470 = vshrl.u32 %v469, 7
    %v471 = vsub.s32 4, %v470
    %v472 = vrot.slane %v462, %v471
    %v473 = vmul.f32 %v428, %v472
    %v474 = vmul.f32 %v433, %v472
    %v475 = vlaneseq
    %v476 = vshrl.u32 %v475, 7
    %v477 = vsub.s32 4, %v476
    %v478 = vrot.slane %v468, %v477
    %480 = vrot.lane.b32.xlu0 %v478, 96
    %v481 = vpop.permute.xlu0 %480
    %v483 = vadd.f32 %v473, %v481
    %v484 = vadd.f32 %v474, %v481
    %v485 = vmax.f32 %v483, 0.0
    %v486 = vmax.f32 %v484, 0.0
    %v488 = vsel %vm32, %v27, 0
    %490 = vmatprep.subr.mxu0 0.0
    %491 = vmatpush1.msra.mxu0 0.0
    %492 = vmatprep.subr.mxu0 0.0
    %493 = vmatpush1.msra.mxu0 0.0
    %494 = vmatprep.subr.mxu0 0.0
    %495 = vmatpush1.msra.mxu0 0.0
    %496 = vmatprep.subr.mxu0 0.0
    %497 = vmatpush1.msra.mxu0 0.0
    %498 = vmatprep.subr.mxu0 0.0
    %499 = vmatpush1.msra.mxu0 0.0
    %500 = vmatprep.subr.mxu0 0.0
    %501 = vmatpush1.msra.mxu0 0.0
    %502 = vmatprep.subr.mxu0 0.0
    %503 = vmatpush1.msra.mxu0 0.0
    %504 = vmatprep.subr.mxu0 0.0
    %505 = vmatpush1.msra.mxu0 0.0
    %506 = vmatprep.subr.mxu0 0.0
    %507 = vmatpush1.msra.mxu0 0.0
    %508 = vmatprep.subr.mxu0 0.0
    %509 = vmatpush1.msra.mxu0 0.0
    %510 = vmatprep.subr.mxu0 0.0
    %511 = vmatpush1.msra.mxu0 0.0
    %512 = vmatprep.subr.mxu0 0.0
    %513 = vmatpush1.msra.mxu0 0.0
    %514 = vmatprep.subr.mxu0 0.0
    %515 = vmatpush1.msra.mxu0 0.0
    %516 = vmatprep.subr.mxu0 0.0
    %517 = vmatpush1.msra.mxu0 0.0
    %518 = vmatprep.subr.mxu0 0.0
    %519 = vmatpush1.msra.mxu0 %v486
    %520 = vmatprep.subr.mxu0 0.0
    %521 = vmatpush1.msra.mxu0 %v485
    %522 = vmatprep.subr.mxu0 0.0
    %523 = vmatpush2.msra.mxu0 0.0
    %524 = vmatprep.subr.mxu0 0.0
    %525 = vmatpush2.msra.mxu0 0.0
    %526 = vmatprep.subr.mxu0 0.0
    %527 = vmatpush2.msra.mxu0 0.0
    %528 = vmatprep.subr.mxu0 0.0
    %529 = vmatpush2.msra.mxu0 0.0
    %530 = vmatprep.subr.mxu0 0.0
    %531 = vmatpush2.msra.mxu0 0.0
    %532 = vmatprep.subr.mxu0 0.0
    %533 = vmatpush2.msra.mxu0 0.0
    %534 = vmatprep.subr.mxu0 0.0
    %535 = vmatpush2.msra.mxu0 0.0
    %536 = vmatprep.subr.mxu0 0.0
    %537 = vmatpush2.msra.mxu0 0.0
    %538 = vmatprep.subr.mxu0 0.0
    %539 = vmatpush2.msra.mxu0 0.0
    %540 = vmatprep.subr.mxu0 0.0
    %541 = vmatpush2.msra.mxu0 0.0
    %542 = vmatprep.subr.mxu0 0.0
    %543 = vmatpush2.msra.mxu0 0.0
    %544 = vmatprep.subr.mxu0 0.0
    %545 = vmatpush2.msra.mxu0 0.0
    %546 = vmatprep.subr.mxu0 0.0
    %547 = vmatpush2.msra.mxu0 0.0
    %548 = vmatprep.subr.mxu0 0.0
    %549 = vmatpush2.msra.mxu0 0.0
    %550 = vmatprep.subr.mxu0 0.0
    %551 = vmatpush2.msra.mxu0 0.0
    %552 = vmatprep.subr.mxu0 0.0
    %553 = vmatpush2.msra.mxu0 0.0
    %554 = vmatprep.mubr.f32.mxu0 0.0
    %555 = vmatmul.mubr.f32.gmra.mxu0 %v488
    %v556 = vpop.f32.mrf.mxu0
    %v557 = vadd.f32 0.0, %v556
    %v558 = vpop.f32.mrf.mxu0
    %559 = vdwg.mxu0
    %v560 = vlaneseq
    %v561 = vshrl.u32 %v560, 7
    %v562 = vsub.s32 2, %v561
    %v563 = vrot.slane %v24, %v562
    %v565 = vsel %vm213, %v557, 0
    %567 = vmatprep.subr.mxu0 0.0
    %568 = vmatpush1.msra.mxu0 0.0
    %569 = vmatprep.subr.mxu0 0.0
    %570 = vmatpush1.msra.mxu0 0.0
    %571 = vmatprep.subr.mxu0 0.0
    %572 = vmatpush1.msra.mxu0 0.0
    %573 = vmatprep.subr.mxu0 0.0
    %574 = vmatpush1.msra.mxu0 0.0
    %575 = vmatprep.subr.mxu0 0.0
    %576 = vmatpush1.msra.mxu0 0.0
    %577 = vmatprep.subr.mxu0 0.0
    %578 = vmatpush1.msra.mxu0 0.0
    %579 = vmatprep.subr.mxu0 0.0
    %580 = vmatpush1.msra.mxu0 0.0
    %581 = vmatprep.subr.mxu0 0.0
    %582 = vmatpush1.msra.mxu0 0.0
    %583 = vmatprep.subr.mxu0 0.0
    %584 = vmatpush1.msra.mxu0 0.0
    %585 = vmatprep.subr.mxu0 0.0
    %586 = vmatpush1.msra.mxu0 0.0
    %587 = vmatprep.subr.mxu0 0.0
    %588 = vmatpush1.msra.mxu0 0.0
    %589 = vmatprep.subr.mxu0 0.0
    %590 = vmatpush1.msra.mxu0 0.0
    %591 = vmatprep.subr.mxu0 0.0
    %592 = vmatpush1.msra.mxu0 %v23
    %593 = vmatprep.subr.mxu0 0.0
    %594 = vmatpush1.msra.mxu0 %v22
    %595 = vmatprep.subr.mxu0 0.0
    %596 = vmatpush1.msra.mxu0 %v21
    %597 = vmatprep.subr.mxu0 0.0
    %598 = vmatpush1.msra.mxu0 %v20
    %599 = vmatprep.subr.mxu0 0.0
    %600 = vmatpush2.msra.mxu0 0.0
    %601 = vmatprep.subr.mxu0 0.0
    %602 = vmatpush2.msra.mxu0 0.0
    %603 = vmatprep.subr.mxu0 0.0
    %604 = vmatpush2.msra.mxu0 0.0
    %605 = vmatprep.subr.mxu0 0.0
    %606 = vmatpush2.msra.mxu0 0.0
    %607 = vmatprep.subr.mxu0 0.0
    %608 = vmatpush2.msra.mxu0 0.0
    %609 = vmatprep.subr.mxu0 0.0
    %610 = vmatpush2.msra.mxu0 0.0
    %611 = vmatprep.subr.mxu0 0.0
    %612 = vmatpush2.msra.mxu0 0.0
    %613 = vmatprep.subr.mxu0 0.0
    %614 = vmatpush2.msra.mxu0 0.0
    %615 = vmatprep.subr.mxu0 0.0
    %616 = vmatpush2.msra.mxu0 0.0
    %617 = vmatprep.subr.mxu0 0.0
    %618 = vmatpush2.msra.mxu0 0.0
    %619 = vmatprep.subr.mxu0 0.0
    %620 = vmatpush2.msra.mxu0 0.0
    %621 = vmatprep.subr.mxu0 0.0
    %622 = vmatpush2.msra.mxu0 0.0
    %623 = vmatprep.subr.mxu0 0.0
    %624 = vmatpush2.msra.mxu0 0.0
    %625 = vmatprep.subr.mxu0 0.0
    %626 = vmatpush2.msra.mxu0 0.0
    %627 = vmatprep.subr.mxu0 0.0
    %628 = vmatpush2.msra.mxu0 0.0
    %629 = vmatprep.subr.mxu0 0.0
    %630 = vmatpush2.msra.mxu0 0.0
    %631 = vmatprep.mubr.f32.mxu0 0.0
    %632 = vmatmul.mubr.f32.gmra.mxu0 %v565
    %v633 = vpop.f32.mrf.mxu0
    %v634 = vadd.f32 %v563, %v633
    %v635 = vpop.f32.mrf.mxu0
    %636 = vdwg.mxu0
    %vm637 = vcmask 517120
    %v638 = vsel %vm637, %v634, -inf
    %639 = vmax.xlane.f32.xlu0 %v638
    %v640 = vpop.xlane.xlu0 %639
    %v641 = vsub.f32 %v634, %v640
    %v642 = vmul.f32 %v641, 1.442695
    %v643 = vpow.pop %v642
    %v644 = vsel %vm637, %v643, 0.0
    %645 = vadd.xlane.f32.xlu0 %v644
    %v646 = vpop.xlane.xlu0 %645
    %v647 = vrcp.pop %v646
    %v648 = vmul.f32 %v643, %v647
    %v649 = vlaneseq
    %v650 = vand.u32 %v649, 127
    %v651 = vcvt.s32.f32 %v650
    %v652 = vmul.f32 %v648, %v651
    %v653 = vsel %vm637, %v652, 0.0
    %654 = vadd.xlane.f32.xlu0 %v653
    %v655 = vpop.xlane.xlu0 %654
    %vm656 = vcmask 523264
    %v657 = vsel %vm656, %v648, %v655
    %658 = vst [vmem:[#allocation2] sm:$0x3] %v657
    // Predicated region
    $region10: #{tpu_custom_call.1} parent=1 // pred_check
      _
    $region11: #{tpu_custom_call.1} parent=1 // pred_check_branch
      %660 = sbr.rel (0) target = $region13
    $region12: #{tpu_custom_call.1} parent=1 // pred_region
      %s662 = ssub.s32 32, 32
      %663 = vsyncadd [#allocation3], %s662
      %s665 = sshll.u32 [#allocation2], 4
      %s666 = int_to_ptr.vmem [resolvable:$true] %s665
      %668 = dma.vmem_to_hbm [thread:$0]  %s666, 32, %s2, [#allocation3]
    $region13: #{tpu_custom_call.1} parent=1 // pred_fallthru
      _
    // Predicated region
    $region14: #{tpu_custom_call.1} parent=1 // pred_check
      _
    $region15: #{tpu_custom_call.1} parent=1 // pred_check_branch
      %670 = sbr.rel (0) target = $region17
    $region16: #{tpu_custom_call.1} parent=1 // pred_region
      %671 = dma.done [#allocation3], 32
    $region17: #{tpu_custom_call.1} parent=1 // pred_fallthru
      _
    %672 = vsyncpa [#allocation3], 1

</llo_original>
